<compile_context>
chip_gen: v7x
topology: tpu7x:2x2x1
jax: 0.10.0
libtpu: 0.0.40
codegen_flags: <defaults>
</compile_context>

<pallas_src>
import functools

import jax
import jax.numpy as jnp
from jax.experimental import pallas as pl
from jax.experimental.pallas import tpu as pltpu


def _pair(v):
    if isinstance(v, (tuple, list)):
        return (int(v[0]), int(v[1]))
    return (int(v), int(v))


def _round_up(v, m):
    return ((v + m - 1) // m) * m


def _conv_matmul_kernel(p_ref, w_ref, b_ref, o_ref, acc_ref):
    """One (group, sample, M-tile, K-tile) step of the im2col matmul.

    p_ref   : (tk, tm)        patch tile, K-major / spatial-minor (streamed)
    w_ref   : (cout_sub, tk)  pre-pruned weight slice for this group
    b_ref   : (cout_sub, 1)   pre-pruned bias for this group (f32)
    o_ref   : (cout_sub, tm)  output tile (lane-dense: tm % 128 == 0)
    acc_ref : (cout_sub, tm)  f32 accumulator, persists across the K axis
    """
    kk = pl.program_id(3)

    @pl.when(kk == 0)
    def _init():
        acc_ref[...] = jnp.zeros_like(acc_ref)

    acc_ref[...] += jnp.dot(w_ref[...], p_ref[...],
                            preferred_element_type=jnp.float32)

    @pl.when(kk == pl.num_programs(3) - 1)
    def _finalize():
        o_ref[...] = (acc_ref[...] + b_ref[...]).astype(o_ref.dtype)


def _im2col_grouped(x, groups, cg, kh, kw, stride, padding, dilation,
                    oh, ow, k_pad, ohw_pad, dtype):
    """NCHW input -> (N, G, k_pad, ohw_pad) K-major patch matrix in `dtype`.

    K ordering is (c, kh, kw) row-major, matching an OIHW weight flattened over
    its last three axes.  The trailing dim is the flattened (oh, ow) output
    position (the lane dim of the kernel's matmul).
    """
    n = x.shape[0]
    sh, sw = stride
    dh, dw = dilation
    # Cast the small, un-inflated input FIRST (halves every downstream pass in
    # bf16 mode), then apply the spatial zero padding.
    xp = jnp.pad(x.astype(dtype), ((0, 0), (0, 0),
                                   (padding[0], padding[0]),
                                   (padding[1], padding[1])))
    views = []
    for ih in range(kh):            # static python loops: kh, kw are constants
        for iw in range(kw):
            h0, w0 = ih * dh, iw * dw
            v = xp[:, :,
                   h0: h0 + (oh - 1) * sh + 1: sh,
                   w0: w0 + (ow - 1) * sw + 1: sw]        # (N, Cin, OH, OW)
            views.append(v.reshape(n, groups, cg, 1, oh * ow))
    # One materialization directly in the kernel layout: concatenate the KH*KW
    # shifted views along the K-minor axis; the reshape below only merges
    # adjacent dims (no extra transpose pass over the inflated tensor).
    k = cg * kh * kw
    pat = jnp.concatenate(views, axis=3).reshape(n, groups, k, oh * ow)
    # Fused zero pad for the K sublane multiple and the ragged spatial tail
    # (identity when no padding is needed).
    return jnp.pad(pat, ((0, 0), (0, 0), (0, k_pad - k), (0, ohw_pad - oh * ow)))


@functools.partial(
    jax.jit,
    static_argnames=("stride", "padding", "dilation", "groups",
                     "tile_m", "compute_dtype"))
def sparse_conv2d(x, weight, bias, weight_mask, bias_mask,
                  stride=1, padding=0, dilation=1, groups=1,
                  tile_m=512, compute_dtype=None):
    """Forward of SparseConv2d: conv2d(x, weight*weight_mask, bias*bias_mask)."""
    stride = _pair(stride)
    padding = _pair(padding)
    dilation = _pair(dilation)
    # bf16 operands by default (v5e's MXU is bf16-native too); f32 accumulate.
    compute_dtype = (jnp.bfloat16 if compute_dtype is None
                     else jnp.dtype(compute_dtype))

    n, cin, h, w = x.shape
    cout, cin_g, kh, kw = weight.shape
    assert cin == cin_g * groups and cout % groups == 0
    cout_g = cout // groups

    oh = (h + 2 * padding[0] - dilation[0] * (kh - 1) - 1) // stride[0] + 1
    ow = (w + 2 * padding[1] - dilation[1] * (kw - 1) - 1) // stride[1] + 1
    ohw = oh * ow
    k = cin_g * kh * kw

    itemsize = jnp.dtype(compute_dtype).itemsize
    sub = {4: 8, 2: 16, 1: 32}.get(itemsize, 8)   # dtype sublane-pack multiple
    cout_sub = _round_up(cout_g, sub)             # sublane pad only (no 128-lane pad)

    # ---- VMEM budget (per TensorCore) ---------------------------------------
    vmem_cap = 64 << 20
    try:
        vmem_cap = int(getattr(pltpu.get_tpu_info(), "vmem_capacity_bytes",
                               vmem_cap))
    except Exception:
        pass
    # Clamp to per-TC capacity: on v7x a per-chip figure (128 MiB over two TCs)
    # would otherwise overshoot the 64 MiB/TC physical limit.
    vmem_cap = min(vmem_cap, 64 << 20)
    budget = (vmem_cap * 3) // 4

    def _vmem_est(t, tk_):
        return (2 * t * tk_ * itemsize            # patches, double-buffered
                + 2 * cout_sub * tk_ * itemsize   # weight slice (2 buffers)
                + 2 * cout_sub * 4                # bias
                + 2 * cout_sub * t * 4            # f32 output, double-buffered
                + cout_sub * t * 4                # f32 accumulator scratch
                + (1 << 20))                      # matmul temporaries / misc

    # ---- tile selection ------------------------------------------------------
    tm = min(_round_up(ohw, 128), max(128, _round_up(int(tile_m), 128)))
    tk = _round_up(k, sub)                        # single resident K slice
    if _vmem_est(tm, tk) > budget:
        # Prefer a K-reduction split (keeps tm large) over shrinking tm.
        tk = _round_up(k, 128)
        while _vmem_est(tm, tk) > budget and tk > 128:
            tk = max(128, _round_up(tk // 2, 128))
        while _vmem_est(tm, tk) > budget and tm > 128:
            tm = max(128, _round_up(tm // 2, 128))

    n_m = -(-ohw // tm)
    tm = _round_up(-(-ohw // n_m), 128)           # rebalance -> minimal M pad
    # v7x megacore balance: avoid an odd number of parallel tiles when an even
    # split costs no extra padding (harmless on single-TC v5e/v6e).
    if (groups * n * n_m) % 2 == 1:
        n_m2 = n_m + 1
        tm2 = _round_up(-(-ohw // n_m2), 128)
        if n_m2 * tm2 <= n_m * tm:
            n_m, tm = n_m2, tm2
    ohw_pad = n_m * tm

    n_k = -(-k // tk)
    if n_k > 1:
        tk = _round_up(-(-k // n_k), 128)         # rebalance K slices
    k_pad = n_k * tk

    # Request only what the kernel needs (+ headroom), per-TC capped.
    vmem_limit = int(min(vmem_cap, max(8 << 20, (_vmem_est(tm, tk) * 3) // 2)))

    # ---- operand prep (mask fusion done ONCE, in f32, outside the kernel) ----
    # TODO(synk): in-kernel im2col (DMA raw input row windows from HBM and
    # assemble the (tk, tm) patch tile in VMEM) to remove the materialized
    # KH*KW-inflated patch matrix entirely.
    patches = _im2col_grouped(x, groups, cin_g, kh, kw, stride, padding,
                              dilation, oh, ow, k_pad, ohw_pad, compute_dtype)

    w_pruned = weight.astype(jnp.float32) * weight_mask.astype(jnp.float32)
    w_g = w_pruned.reshape(groups, cout_g, k).astype(compute_dtype)
    w_g = jnp.pad(w_g, ((0, 0), (0, cout_sub - cout_g), (0, k_pad - k)))

    if bias is None:
        b_g = jnp.zeros((groups, cout_sub, 1), jnp.float32)
    else:
        bm = jnp.ones_like(bias) if bias_mask is None else bias_mask
        b_fused = bias.astype(jnp.float32) * bm.astype(jnp.float32)
        b_g = jnp.pad(b_fused.reshape(groups, cout_g, 1),
                      ((0, 0), (0, cout_sub - cout_g), (0, 0)))

    out = pl.pallas_call(
        _conv_matmul_kernel,
        out_shape=jax.ShapeDtypeStruct((n, groups, cout_sub, ohw_pad),
                                       jnp.float32),
        grid_spec=pltpu.PrefetchScalarGridSpec(
            num_scalar_prefetch=0,
            grid=(groups, n, n_m, n_k),
            in_specs=[
                pl.BlockSpec((None, None, tk, tm),
                             lambda g, b, i, kk: (b, g, kk, i)),     # patches
                pl.BlockSpec((None, cout_sub, tk),
                             lambda g, b, i, kk: (g, 0, kk)),        # weight
                pl.BlockSpec((None, cout_sub, 1),
                             lambda g, b, i, kk: (g, 0, 0)),         # bias
            ],
            out_specs=pl.BlockSpec((None, None, cout_sub, tm),
                                   lambda g, b, i, kk: (b, g, 0, i)),
            scratch_shapes=[pltpu.VMEM((cout_sub, tm), jnp.float32)],
        ),
        compiler_params=pltpu.CompilerParams(
            dimension_semantics=("parallel", "parallel", "parallel",
                                 "arbitrary"),
            vmem_limit_bytes=vmem_limit,
        ),
    )(patches, w_g, b_g)

    # (N, G, cout_sub, ohw_pad) is already channel-major per group and
    # spatial-minor: NCHW needs only a pad-slice + reshape, no transpose pass.
    out = out[:, :, :cout_g, :ohw].reshape(n, cout, oh, ow)
    return out.astype(x.dtype)


def _reference_conv(x, weight, bias, weight_mask, bias_mask,
                    stride, padding, dilation, groups):
    pruned_w = weight * weight_mask
    out = jax.lax.conv_general_dilated(
        x, pruned_w,
        window_strides=_pair(stride),
        padding=[(p, p) for p in _pair(padding)],
        rhs_dilation=_pair(dilation),
        feature_group_count=groups,
        dimension_numbers=("NCHW", "OIHW", "NCHW"),
        precision=jax.lax.Precision.HIGHEST,
    )
    if bias is not None:
        b = bias if bias_mask is None else bias * bias_mask
        out = out + b.reshape(1, -1, 1, 1)
    return out


if __name__ == "__main__":
    key = jax.random.PRNGKey(0)
    k_x, k_w, k_b, k_m = jax.random.split(key, 4)

    # SparseConv2d(in_channels=4, out_channels=8, kernel_size=3,
    #              stride=1, padding=1, dilation=1, groups=1, bias=True)
    N, Cin, H, W = 2, 4, 16, 16
    Cout, KH, KW = 8, 3, 3

    x = jax.random.normal(k_x, (N, Cin, H, W), jnp.float32)
    weight = jax.random.normal(k_w, (Cout, Cin, KH, KW), jnp.float32)
    bias = jax.random.normal(k_b, (Cout,), jnp.float32)
    weight_mask = (jax.random.uniform(k_m, weight.shape) > 0.5).astype(jnp.float32)
    bias_mask = jnp.ones((Cout,), jnp.float32).at[0].set(0.0)

    # --- Test 1: f32 operand path, tight tolerance ---------------------------
    out = jax.block_until_ready(
        sparse_conv2d(x, weight, bias, weight_mask, bias_mask,
                      stride=1, padding=1, dilation=1, groups=1,
                      compute_dtype=jnp.float32))
    ref = _reference_conv(x, weight, bias, weight_mask, bias_mask, 1, 1, 1, 1)
    assert out.shape == (N, Cout, H, W), out.shape
    assert jnp.allclose(out, ref, rtol=1e-3, atol=1e-2), \
        float(jnp.max(jnp.abs(out - ref)))

    # --- Test 2: default bf16 operands, f32 accumulation ---------------------
    out2 = jax.block_until_ready(
        sparse_conv2d(x, weight, bias, weight_mask, bias_mask,
                      stride=1, padding=1, dilation=1, groups=1))
    assert out2.shape == (N, Cout, H, W), out2.shape
    assert jnp.allclose(out2, ref, rtol=5e-2, atol=3e-1), \
        float(jnp.max(jnp.abs(out2 - ref)))

    # --- Test 3: grouped + strided + dilated, no bias (ragged M pad path) ----
    groups3 = 2
    w3 = jax.random.normal(k_w, (Cout, Cin // groups3, KH, KW), jnp.float32)
    wm3 = (jax.random.uniform(k_m, w3.shape) > 0.3).astype(jnp.float32)
    out3 = jax.block_until_ready(
        sparse_conv2d(x, w3, None, wm3, None,
                      stride=2, padding=2, dilation=2, groups=groups3))
    ref3 = _reference_conv(x, w3, None, wm3, None, 2, 2, 2, groups3)
    assert out3.shape == ref3.shape, (out3.shape, ref3.shape)
    assert jnp.allclose(out3, ref3, rtol=5e-2, atol=3e-1), \
        float(jnp.max(jnp.abs(out3 - ref3)))

    print("KERNEL_OK")
</pallas_src>

<mosaic_0001>
module attributes {stable_mosaic.version = 11 : i64} {
  func.func @_conv_matmul_kernel(%arg0: i32, %arg1: i32, %arg2: i32, %arg3: i32, %arg4: memref<1x1x40x256xf32, #tpu.memory_space<vmem>>, %arg5: memref<1x8x40xf32, #tpu.memory_space<vmem>>, %arg6: memref<1x8x1xf32, #tpu.memory_space<vmem>>, %arg7: memref<1x1x8x256xf32, #tpu.memory_space<vmem>>, %arg8: memref<8x256xf32, #tpu.memory_space<vmem>>) attributes {dimension_semantics = [#tpu.dimension_semantics<parallel>, #tpu.dimension_semantics<parallel>, #tpu.dimension_semantics<parallel>, #tpu.dimension_semantics<arbitrary>], iteration_bounds = array<i64: 1, 2, 1, 1>, scalar_prefetch = 0 : i64, scratch_operands = 1 : i64, tpu.core_type = #tpu.core_type<tc>, window_params = [{transform_indices = @transform_0, window_bounds = array<i64: 1, 1, 40, 256>}, {transform_indices = @transform_1, window_bounds = array<i64: 1, 8, 40>}, {transform_indices = @transform_2, window_bounds = array<i64: 1, 8, 1>}, {transform_indices = @transform_3, window_bounds = array<i64: 1, 1, 8, 256>}]} {
    %c0_i32 = arith.constant 0 : i32
    %0 = arith.cmpi eq, %arg3, %c0_i32 : i32
    %1 = arith.extui %0 : i1 to i32
    %c0_i32_0 = arith.constant 0 : i32
    %2 = arith.cmpi ne, %1, %c0_i32_0 : i32
    scf.if %2 {
      %cst_13 = arith.constant 0.000000e+00 : f32
      %14 = vector.broadcast %cst_13 : f32 to vector<8x256xf32>
      %c0_14 = arith.constant 0 : index
      %c0_15 = arith.constant 0 : index
      %15 = vector.load %arg8[%c0_14, %c0_15] : memref<8x256xf32, #tpu.memory_space<vmem>>, vector<8x256xf32>
      tpu.vector_store %arg8[%c0_14, %c0_15], %14 {strides = array<i32>} : memref<8x256xf32, #tpu.memory_space<vmem>>, vector<8x256xf32>,
    } else {
    }
    %c0 = arith.constant 0 : index
    %c0_1 = arith.constant 0 : index
    %3 = vector.load %arg8[%c0, %c0_1] : memref<8x256xf32, #tpu.memory_space<vmem>>, vector<8x256xf32>
    %c0_2 = arith.constant 0 : index
    %c0_3 = arith.constant 0 : index
    %c0_4 = arith.constant 0 : index
    %4 = vector.load %arg5[%c0_2, %c0_3, %c0_4] : memref<1x8x40xf32, #tpu.memory_space<vmem>>, vector<1x8x40xf32>
    %5 = vector.shape_cast %4 : vector<1x8x40xf32> to vector<8x40xf32>
    %c0_5 = arith.constant 0 : index
    %c0_6 = arith.constant 0 : index
    %c0_7 = arith.constant 0 : index
    %c0_8 = arith.constant 0 : index
    %6 = vector.load %arg4[%c0_5, %c0_6, %c0_7, %c0_8] : memref<1x1x40x256xf32, #tpu.memory_space<vmem>>, vector<1x1x40x256xf32>
    %7 = vector.shape_cast %6 : vector<1x1x40x256xf32> to vector<40x256xf32>
    %cst = arith.constant dense<0.000000e+00> : vector<8x256xf32>
    %8 = tpu.matmul %5, %7, %cst {dimension_numbers = #tpu.dot_dimension_numbers<[1], [0], [0], [1], [0, 0, 1, 1], [], []>} : vector<8x40xf32>, vector<40x256xf32>, vector<8x256xf32> -> vector<8x256xf32>
    %9 = arith.addf %3, %8 : vector<8x256xf32>
    %c0_9 = arith.constant 0 : index
    %c0_10 = arith.constant 0 : index
    %10 = vector.load %arg8[%c0_9, %c0_10] : memref<8x256xf32, #tpu.memory_space<vmem>>, vector<8x256xf32>
    tpu.vector_store %arg8[%c0_9, %c0_10], %9 {strides = array<i32>} : memref<8x256xf32, #tpu.memory_space<vmem>>, vector<8x256xf32>,
    %c0_i32_11 = arith.constant 0 : i32
    %11 = arith.cmpi eq, %arg3, %c0_i32_11 : i32
    %12 = arith.extui %11 : i1 to i32
    %c0_i32_12 = arith.constant 0 : i32
    %13 = arith.cmpi ne, %12, %c0_i32_12 : i32
    scf.if %13 {
      %c0_13 = arith.constant 0 : index
      %c0_14 = arith.constant 0 : index
      %14 = vector.load %arg8[%c0_13, %c0_14] : memref<8x256xf32, #tpu.memory_space<vmem>>, vector<8x256xf32>
      %c0_15 = arith.constant 0 : index
      %c0_16 = arith.constant 0 : index
      %c0_17 = arith.constant 0 : index
      %15 = vector.load %arg6[%c0_15, %c0_16, %c0_17] : memref<1x8x1xf32, #tpu.memory_space<vmem>>, vector<1x8x1xf32>
      %16 = vector.shape_cast %15 : vector<1x8x1xf32> to vector<8x1xf32>
      %17 = vector.broadcast %16 : vector<8x1xf32> to vector<8x256xf32>
      %18 = arith.addf %14, %17 : vector<8x256xf32>
      %c0_18 = arith.constant 0 : index
      %c0_19 = arith.constant 0 : index
      %c0_20 = arith.constant 0 : index
      %c0_21 = arith.constant 0 : index
      %19 = vector.load %arg7[%c0_18, %c0_19, %c0_20, %c0_21] : memref<1x1x8x256xf32, #tpu.memory_space<vmem>>, vector<1x1x8x256xf32>
      %20 = vector.shape_cast %19 : vector<1x1x8x256xf32> to vector<8x256xf32>
      %21 = vector.shape_cast %18 : vector<8x256xf32> to vector<1x1x8x256xf32>
      tpu.vector_store %arg7[%c0_18, %c0_19, %c0_20, %c0_21], %21 {strides = array<i32>} : memref<1x1x8x256xf32, #tpu.memory_space<vmem>>, vector<1x1x8x256xf32>,
    } else {
    }
    return
  }
  func.func @transform_0(%arg0: i32, %arg1: i32, %arg2: i32, %arg3: i32) -> (i32, i32, i32, i32) {
    %c0_i32 = arith.constant 0 : i32
    return %arg1, %arg0, %arg3, %arg2 : i32, i32, i32, i32
  }
  func.func @transform_1(%arg0: i32, %arg1: i32, %arg2: i32, %arg3: i32) -> (i32, i32, i32) {
    %c0_i32 = arith.constant 0 : i32
    %c0_i32_0 = arith.constant 0 : i32
    return %arg0, %c0_i32, %arg3 : i32, i32, i32
  }
  func.func @transform_2(%arg0: i32, %arg1: i32, %arg2: i32, %arg3: i32) -> (i32, i32, i32) {
    %c0_i32 = arith.constant 0 : i32
    %c0_i32_0 = arith.constant 0 : i32
    %c0_i32_1 = arith.constant 0 : i32
    return %arg0, %c0_i32, %c0_i32_0 : i32, i32, i32
  }
  func.func @transform_3(%arg0: i32, %arg1: i32, %arg2: i32, %arg3: i32) -> (i32, i32, i32, i32) {
    %c0_i32 = arith.constant 0 : i32
    %c0_i32_0 = arith.constant 0 : i32
    return %arg1, %arg0, %c0_i32, %arg2 : i32, i32, i32, i32
  }
}

</mosaic_0001>

<llo_original>
// kernel: mul.2
$region0: #{mul.2}
  #allocation0 [shape = 's32[1]{0}', space=sflag, size = 0x4, scoped, tag = 'scoped memory for mul.2']
  %s0 = inlined_call_operand.vmem [shape: f32[8,4,3,3], index: 0, kind: input, shape index: {}]
  %s1 = inlined_call_operand.vmem [shape: f32[8,4,3,3], index: 1, kind: input, shape index: {}]
  %s2 = inlined_call_operand.vmem [shape: f32[8,4,3,3], index: 2, kind: output, shape index: {}]
  %v3 = vld [vmem:[%s0] sm:$0xf]
  %v4 = vld [vmem:[%s1] sm:$0xf]
  %5 = xla_tuple %v3, %v4
  %6 = xla_tuple %5
  %v7 = vmul.f32 %v3, %v4
  %8 = xla_tuple %v7
  %9 = vst [vmem:[%s2] sm:$0xf] %v7
  %s10 = scalar_lea.vmem %s0, 12
  %v11 = vld [vmem:[%s10] sm:$0xf]
  %s12 = scalar_lea.vmem %s1, 12
  %v13 = vld [vmem:[%s12] sm:$0xf]
  %14 = xla_tuple %v11, %v13
  %15 = xla_tuple %14
  %v16 = vmul.f32 %v11, %v13
  %17 = xla_tuple %v16
  %s18 = scalar_lea.vmem %s2, 12
  %19 = vst [vmem:[%s18] sm:$0xf] %v16
  %s20 = scalar_lea.vmem %s0, 24
  %v21 = vld [vmem:[%s20] sm:$0xf]
  %s22 = scalar_lea.vmem %s1, 24
  %v23 = vld [vmem:[%s22] sm:$0xf]
  %24 = xla_tuple %v21, %v23
  %25 = xla_tuple %24
  %v26 = vmul.f32 %v21, %v23
  %27 = xla_tuple %v26
  %s28 = scalar_lea.vmem %s2, 24
  %29 = vst [vmem:[%s28] sm:$0xf] %v26
  %s30 = scalar_lea.vmem %s0, 4
  %v31 = vld [vmem:[%s30] sm:$0xf]
  %s32 = scalar_lea.vmem %s1, 4
  %v33 = vld [vmem:[%s32] sm:$0xf]
  %34 = xla_tuple %v31, %v33
  %35 = xla_tuple %34
  %v36 = vmul.f32 %v31, %v33
  %37 = xla_tuple %v36
  %s38 = scalar_lea.vmem %s2, 4
  %39 = vst [vmem:[%s38] sm:$0xf] %v36
  %s40 = scalar_lea.vmem %s0, 16
  %v41 = vld [vmem:[%s40] sm:$0xf]
  %s42 = scalar_lea.vmem %s1, 16
  %v43 = vld [vmem:[%s42] sm:$0xf]
  %44 = xla_tuple %v41, %v43
  %45 = xla_tuple %44
  %v46 = vmul.f32 %v41, %v43
  %47 = xla_tuple %v46
  %s48 = scalar_lea.vmem %s2, 16
  %49 = vst [vmem:[%s48] sm:$0xf] %v46
  %s50 = scalar_lea.vmem %s0, 28
  %v51 = vld [vmem:[%s50] sm:$0xf]
  %s52 = scalar_lea.vmem %s1, 28
  %v53 = vld [vmem:[%s52] sm:$0xf]
  %54 = xla_tuple %v51, %v53
  %55 = xla_tuple %54
  %v56 = vmul.f32 %v51, %v53
  %57 = xla_tuple %v56
  %s58 = scalar_lea.vmem %s2, 28
  %59 = vst [vmem:[%s58] sm:$0xf] %v56
  %s60 = scalar_lea.vmem %s0, 8
  %v61 = vld [vmem:[%s60] sm:$0xf]
  %s62 = scalar_lea.vmem %s1, 8
  %v63 = vld [vmem:[%s62] sm:$0xf]
  %64 = xla_tuple %v61, %v63
  %65 = xla_tuple %64
  %v66 = vmul.f32 %v61, %v63
  %67 = xla_tuple %v66
  %s68 = scalar_lea.vmem %s2, 8
  %69 = vst [vmem:[%s68] sm:$0xf] %v66
  %s70 = scalar_lea.vmem %s0, 20
  %v71 = vld [vmem:[%s70] sm:$0xf]
  %s72 = scalar_lea.vmem %s1, 20
  %v73 = vld [vmem:[%s72] sm:$0xf]
  %74 = xla_tuple %v71, %v73
  %75 = xla_tuple %74
  %v76 = vmul.f32 %v71, %v73
  %77 = xla_tuple %v76
  %s78 = scalar_lea.vmem %s2, 20
  %79 = vst [vmem:[%s78] sm:$0xf] %v76
  %s80 = scalar_lea.vmem %s0, 32
  %v81 = vld [vmem:[%s80] sm:$0xf]
  %s82 = scalar_lea.vmem %s1, 32
  %v83 = vld [vmem:[%s82] sm:$0xf]
  %84 = xla_tuple %v81, %v83
  %85 = xla_tuple %84
  %v86 = vmul.f32 %v81, %v83
  %87 = xla_tuple %v86
  %s88 = scalar_lea.vmem %s2, 32
  %89 = vst [vmem:[%s88] sm:$0xf] %v86

// kernel: sparse_conv2d.1
$region0: #{sparse_conv2d.1}
  #allocation0 [shape = 'u32[]', space=smem, size = 0x4, offset = 0x4, fixed_abs, tag = 'smem constant byte address 0x4 - core index']
  #allocation1 [shape = 'u32[144,128]{1,0:T(1,128)}', space=vmem, size = 0x12000, scoped, tag = 'internal scratch']
  #allocation2 [shape = 'f32[8,256]{1,0:T(8,128)}', space=vmem, size = 0x2000, scoped, tag = 'scratch operand']
  %s0 = inlined_call_operand.vmem [shape: f32[2,1,40,256], index: 0, kind: input, shape index: {}]
  %s1 = inlined_call_operand.vmem [shape: f32[1,8,40], index: 1, kind: input, shape index: {}]
  %s2 = inlined_call_operand.vmem [shape: f32[1,8,1], index: 2, kind: input, shape index: {}]
  %s3 = inlined_call_operand.vmem [shape: f32[2,1,8,256], index: 3, kind: output, shape index: {}]
  %s4 = sld [smem:[#allocation0]]
  $region53: #{sparse_conv2d.1} parent=0
    _
  %s6 = ssub.s32 1, %s4
  %s7 = scalar_select 0, %s6, %s4
  loop: start=0, step=1, limit=4
  $region2: #{sparse_conv2d.1} parent=0 // loop_pre_header
    _
  $region3: #{sparse_conv2d.1} parent=0 // loop_header
    %s9 = sphi 0, %s13
    %p10 = scmp.ge.s32.totalorder %s9, 4
    %s16 = sphi 0, %s42
    %s17 = sphi 0, %s38
    %s18 = sphi 0, %s34
    %s19 = sphi 0, %s30
    %s20 = sphi 0, %s16
    %s21 = sphi 0, %s17
    %s22 = sphi 0, %s18
    %s23 = sphi 0, %s19
    %s24 = sphi 0, %s20
    %s25 = sphi 0, %s21
    %s26 = sphi 0, %s22
    %s27 = sphi 0, %s23
    %s51 = sphi 0, %s53
    %s54 = sphi 0, %s51
    %s55 = sphi 0, %s54
    %s71 = sphi 0, %s55
    %s79 = sphi 0, %s81
    %s82 = sphi 0, %s79
    %s83 = sphi 0, %s82
    %s99 = sphi 0, %s83
    %s105 = sphi 0, %s107
    %s108 = sphi 0, %s105
    %s109 = sphi 0, %s108
    %s125 = sphi 0, %s109
    %s135 = sphi 0, %s137
    %s138 = sphi 0, %s135
    %s139 = sphi 0, %s138
    %s155 = sphi 0, %s139
  $region4: #{sparse_conv2d.1} parent=0 // loop_header_branch
    %12 = sbr.rel (%p10) target = $region8
  $region5: #{sparse_conv2d.1} parent=0 // loop_body
    %s14 = ssub.s32 %s9, 1
    %s15 = ssub.s32 %s9, 2
    %s28 = sadd.s32 1, %s19
    %p29 = scmp.ge.s32.totalorder %s28, 1
    %s30 = scalar_select %p29, 0, %s28
    %s31 = sadd.s32 1, %s18
    %s32 = scalar_select %p29, %s31, %s18
    %p33 = scmp.ge.s32.totalorder %s32, 1
    %s34 = scalar_select %p33, 0, %s32
    %s35 = sadd.s32 1, %s17
    %s36 = scalar_select %p33, %s35, %s17
    %p37 = scmp.ge.s32.totalorder %s36, 2
    %s38 = scalar_select %p37, 0, %s36
    %s39 = sadd.s32 1, %s16
    %s40 = scalar_select %p37, %s39, %s16
    %p41 = scmp.ge.s32.totalorder %s40, 1
    %s42 = scalar_select %p41, 0, %s40
    %s43 = ssub.s32 %s17, %s38
    %s44 = ssub.s32 %s16, %s42
    %s45 = sor.u32 %s43, %s44
    %s46 = ssub.s32 %s19, %s30
    %s47 = sor.u32 %s45, %s46
    %s48 = ssub.s32 %s18, %s34
    %s49 = sor.u32 %s47, %s48
    %p50 = scmp.eq.s32.totalorder %s49, 0
    %s52 = sadd.s32 %s51, 1
    %s53 = scalar_select %p50, %s51, %s52
    %p56 = pneg %p50
    %p57 = scmp.eq.s32.totalorder %s9, 1
    %p58 = por %p56, %p57
    %p59 = scmp.ne.s32.totalorder %s51, %s54
    %p60 = scmp.eq.s32.totalorder %s9, 0
    %p61 = por %p59, %p60
    %p62 = scmp.ne.s32.totalorder %s51, %s54
    %p63 = scmp.eq.s32.totalorder %s14, 1
    %p64 = por %p62, %p63
    %p65 = scmp.ne.s32.totalorder %s54, %s55
    %p66 = scmp.eq.s32.totalorder %s14, 0
    %p67 = por %p65, %p66
    %p68 = scmp.ne.s32.totalorder %s54, %s55
    %p69 = scmp.eq.s32.totalorder %s15, 1
    %p70 = por %p68, %p69
    %p72 = scmp.ne.s32.totalorder %s55, %s71
    %p73 = scmp.eq.s32.totalorder %s15, 0
    %p74 = por %p72, %p73
    %s75 = ssub.s32 %s16, %s42
    %s76 = ssub.s32 %s19, %s30
    %s77 = sor.u32 %s75, %s76
    %p78 = scmp.eq.s32.totalorder %s77, 0
    %s80 = sadd.s32 %s79, 1
    %s81 = scalar_select %p78, %s79, %s80
    %p84 = pneg %p78
    %p85 = scmp.eq.s32.totalorder %s9, 1
    %p86 = por %p84, %p85
    %p87 = scmp.ne.s32.totalorder %s79, %s82
    %p88 = scmp.eq.s32.totalorder %s9, 0
    %p89 = por %p87, %p88
    %p90 = scmp.ne.s32.totalorder %s79, %s82
    %p91 = scmp.eq.s32.totalorder %s14, 1
    %p92 = por %p90, %p91
    %p93 = scmp.ne.s32.totalorder %s82, %s83
    %p94 = scmp.eq.s32.totalorder %s14, 0
    %p95 = por %p93, %p94
    %p96 = scmp.ne.s32.totalorder %s82, %s83
    %p97 = scmp.eq.s32.totalorder %s15, 1
    %p98 = por %p96, %p97
    %p100 = scmp.ne.s32.totalorder %s83, %s99
    %p101 = scmp.eq.s32.totalorder %s15, 0
    %p102 = por %p100, %p101
    %s103 = ssub.s32 %s16, %s42
    %p104 = scmp.eq.s32.totalorder %s103, 0
    %s106 = sadd.s32 %s105, 1
    %s107 = scalar_select %p104, %s105, %s106
    %p110 = pneg %p104
    %p111 = scmp.eq.s32.totalorder %s9, 1
    %p112 = por %p110, %p111
    %p113 = scmp.ne.s32.totalorder %s105, %s108
    %p114 = scmp.eq.s32.totalorder %s9, 0
    %p115 = por %p113, %p114
    %p116 = scmp.ne.s32.totalorder %s105, %s108
    %p117 = scmp.eq.s32.totalorder %s14, 1
    %p118 = por %p116, %p117
    %p119 = scmp.ne.s32.totalorder %s108, %s109
    %p120 = scmp.eq.s32.totalorder %s14, 0
    %p121 = por %p119, %p120
    %p122 = scmp.ne.s32.totalorder %s108, %s109
    %p123 = scmp.eq.s32.totalorder %s15, 1
    %p124 = por %p122, %p123
    %p126 = scmp.ne.s32.totalorder %s109, %s125
    %p127 = scmp.eq.s32.totalorder %s15, 0
    %p128 = por %p126, %p127
    %s129 = ssub.s32 %s17, %s38
    %s130 = ssub.s32 %s16, %s42
    %s131 = sor.u32 %s129, %s130
    %s132 = ssub.s32 %s18, %s34
    %s133 = sor.u32 %s131, %s132
    %p134 = scmp.eq.s32.totalorder %s133, 0
    %s136 = sadd.s32 %s135, 1
    %s137 = scalar_select %p134, %s135, %s136
    %p140 = pneg %p134
    %p141 = scmp.eq.s32.totalorder %s9, 1
    %p142 = por %p140, %p141
    %p143 = scmp.ne.s32.totalorder %s135, %s138
    %p144 = scmp.eq.s32.totalorder %s9, 0
    %p145 = por %p143, %p144
    %p146 = scmp.ne.s32.totalorder %s135, %s138
    %p147 = scmp.eq.s32.totalorder %s14, 1
    %p148 = por %p146, %p147
    %p149 = scmp.ne.s32.totalorder %s138, %s139
    %p150 = scmp.eq.s32.totalorder %s14, 0
    %p151 = por %p149, %p150
    %p152 = scmp.ne.s32.totalorder %s138, %s139
    %p153 = scmp.eq.s32.totalorder %s15, 1
    %p154 = por %p152, %p153
    %p156 = scmp.ne.s32.totalorder %s139, %s155
    %p157 = scmp.eq.s32.totalorder %s15, 0
    %p158 = por %p156, %p157
    %p159 = scmp.le.s32.totalorder 1, %s9
    %p160 = scmp.lt.s32.totalorder %s9, 3
    %p161 = pnand %p159, %p160
    %p162 = pneg %p161
    // Predicated region
    $region9: #{sparse_conv2d.1} parent=5 // pred_check
      _
    $region10: #{sparse_conv2d.1} parent=5 // pred_check_branch
      %164 = sbr.rel (%p161) target = $region12
    $region11: #{sparse_conv2d.1} parent=5 // pred_region
      %s165 = ssub.s32 %s9, 1
      // Predicated region
      $region13: #{sparse_conv2d.1} parent=11 // pred_check
        %p166 = pneg %p95
      $region14: #{sparse_conv2d.1} parent=11 // pred_check_branch
        %168 = sbr.rel (%p166) target = $region16
      $region15: #{sparse_conv2d.1} parent=11 // pred_region
        %p169 = scmp.lt.s32.totalorder %s20, 0
        %s170 = scalar_select %p169, %s20, 0
        %p171 = scmp.lt.s32.totalorder %s23, 0
        %s172 = scalar_select %p171, %s23, 0
        %s173 = sadd.s32 %s172, %s170
        %s174 = smul.addr %s173, 8
        %s175 = scalar_lea.vmem %s1, %s174
      $region16: #{sparse_conv2d.1} parent=11 // pred_fallthru
        _
      // Predicated region
      $region17: #{sparse_conv2d.1} parent=11 // pred_check
        %p176 = pneg %p121
      $region18: #{sparse_conv2d.1} parent=11 // pred_check_branch
        %178 = sbr.rel (%p176) target = $region20
      $region19: #{sparse_conv2d.1} parent=11 // pred_region
        %p179 = scmp.lt.s32.totalorder %s20, 0
        %s180 = scalar_select %p179, %s20, 0
        %s181 = smul.addr %s180, 8
        %s182 = scalar_lea.vmem %s2, %s181
      $region20: #{sparse_conv2d.1} parent=11 // pred_fallthru
        _
    $region12: #{sparse_conv2d.1} parent=5 // pred_fallthru
      _
    %p183 = scmp.lt.s32.totalorder %s9, 2
    // Predicated region
    $region21: #{sparse_conv2d.1} parent=5 // pred_check
      %p184 = pneg %p183
    $region22: #{sparse_conv2d.1} parent=5 // pred_check_branch
      %186 = sbr.rel (%p184) target = $region24
    $region23: #{sparse_conv2d.1} parent=5 // pred_region
      // Predicated region
      $region25: #{sparse_conv2d.1} parent=23 // pred_check
        %p187 = pneg %p61
      $region26: #{sparse_conv2d.1} parent=23 // pred_check_branch
        %189 = sbr.rel (%p187) target = $region28
      $region27: #{sparse_conv2d.1} parent=23 // pred_region
        %s190 = smul.u32 5, %s19
        %s191 = smul.u32 2, %s18
        %p192 = scmp.lt.s32.totalorder %s17, 1
        %s193 = scalar_select %p192, %s17, 1
        %p194 = scmp.lt.s32.totalorder %s16, 0
        %s195 = scalar_select %p194, %s16, 0
        %p196 = scmp.lt.s32.totalorder %s190, 4
        %s197 = scalar_select %p196, %s190, 4
        %p198 = scmp.lt.s32.totalorder %s191, 1
        %s199 = scalar_select %p198, %s191, 1
        %s200 = smul.addr %s197, 2
        %s201 = sadd.s32 %s199, %s200
        %s202 = smul.addr %s195, 10
        %s203 = sadd.s32 %s201, %s202
        %s204 = smul.addr %s193, 10
        %s205 = sadd.s32 %s203, %s204
        %s206 = smul.addr %s205, 8
        %s207 = scalar_lea.vmem %s0, %s206
        %s208 = smul.u32 5, %s19
        %s209 = smul.u32 2, %s18
      $region28: #{sparse_conv2d.1} parent=23 // pred_fallthru
        _
    $region24: #{sparse_conv2d.1} parent=5 // pred_fallthru
      _
    %p210 = scmp.le.s32.totalorder 1, %s9
    %p211 = scmp.lt.s32.totalorder %s9, 3
    %p212 = pnand %p210, %p211
    %p213 = pneg %p212
    // Predicated region
    $region29: #{sparse_conv2d.1} parent=5 // pred_check
      _
    $region30: #{sparse_conv2d.1} parent=5 // pred_check_branch
      %215 = sbr.rel (%p212) target = $region32
    $region31: #{sparse_conv2d.1} parent=5 // pred_region
      %s216 = ssub.s32 %s9, 1
      %s217 = smul.u32 5, %s23
      %s218 = smul.u32 2, %s22
      %p219 = scmp.lt.s32.totalorder %s21, 1
      %s220 = scalar_select %p219, %s21, 1
      %p221 = scmp.lt.s32.totalorder %s20, 0
      %s222 = scalar_select %p221, %s20, 0
      %p223 = scmp.lt.s32.totalorder %s217, 4
      %s224 = scalar_select %p223, %s217, 4
      %p225 = scmp.lt.s32.totalorder %s218, 1
      %s226 = scalar_select %p225, %s218, 1
      %s227 = smul.addr %s224, 2
      %s228 = sadd.s32 %s226, %s227
      %s229 = smul.addr %s222, 10
      %s230 = sadd.s32 %s228, %s229
      %s231 = smul.addr %s220, 10
      %s232 = sadd.s32 %s230, %s231
      %s233 = smul.addr %s232, 8
      %s234 = scalar_lea.vmem %s0, %s233
      %p235 = pneg %p67
      %p236 = pneg %p64
      %p237 = scmp.lt.s32.totalorder %s20, 0
      %s238 = scalar_select %p237, %s20, 0
      %p239 = scmp.lt.s32.totalorder %s23, 0
      %s240 = scalar_select %p239, %s23, 0
      %s241 = sadd.s32 %s240, %s238
      %s242 = smul.addr %s241, 8
      %s243 = scalar_lea.vmem %s1, %s242
      %p244 = pneg %p95
      %p245 = pneg %p92
      %p246 = scmp.lt.s32.totalorder %s20, 0
      %s247 = scalar_select %p246, %s20, 0
      %s248 = smul.addr %s247, 8
      %s249 = scalar_lea.vmem %s2, %s248
      %p250 = pneg %p121
      %p251 = pneg %p118
      %p252 = pneg %p151
      %p253 = pneg %p148
      %s254 = smul.u32 2, %s22
      %p255 = scmp.lt.s32.totalorder %s21, 1
      %s256 = scalar_select %p255, %s21, 1
      %p257 = scmp.lt.s32.totalorder %s20, 0
      %s258 = scalar_select %p257, %s20, 0
      %p259 = scmp.lt.s32.totalorder %s254, 1
      %s260 = scalar_select %p259, %s254, 1
      %s261 = smul.addr %s258, 2
      %s262 = sadd.s32 %s260, %s261
      %s263 = smul.addr %s256, 2
      %s264 = sadd.s32 %s262, %s263
      %s265 = smul.addr %s264, 8
      %s266 = scalar_lea.vmem %s3, %s265
      %s267 = smul.u32 5, %s23
      %s268 = smul.u32 2, %s22
      %p269 = scmp.lt.s32.totalorder %s21, 1
      %s270 = scalar_select %p269, %s21, 1
      %p271 = scmp.lt.s32.totalorder %s20, 0
      %s272 = scalar_select %p271, %s20, 0
      %p273 = scmp.lt.s32.totalorder %s267, 4
      %s274 = scalar_select %p273, %s267, 4
      %p275 = scmp.lt.s32.totalorder %s268, 1
      %s276 = scalar_select %p275, %s268, 1
      %s277 = smul.addr %s274, 2
      %s278 = sadd.s32 %s276, %s277
      %s279 = smul.addr %s272, 10
      %s280 = sadd.s32 %s278, %s279
      %s281 = smul.addr %s270, 10
      %s282 = sadd.s32 %s280, %s281
      %s283 = smul.addr %s282, 8
      %s284 = scalar_lea.vmem %s0, %s283
      %s285 = smul.u32 5, %s23
      %s286 = smul.u32 2, %s22
      %p287 = scmp.lt.s32.totalorder %s20, 0
      %s288 = scalar_select %p287, %s20, 0
      %p289 = scmp.lt.s32.totalorder %s23, 0
      %s290 = scalar_select %p289, %s23, 0
      %s291 = sadd.s32 %s290, %s288
      %s292 = smul.addr %s291, 8
      %s293 = scalar_lea.vmem %s1, %s292
      %p294 = scmp.lt.s32.totalorder %s20, 0
      %s295 = scalar_select %p294, %s20, 0
      %s296 = smul.addr %s295, 8
      %s297 = scalar_lea.vmem %s2, %s296
      %s298 = smul.u32 2, %s22
      %p299 = scmp.lt.s32.totalorder %s21, 1
      %s300 = scalar_select %p299, %s21, 1
      %p301 = scmp.lt.s32.totalorder %s20, 0
      %s302 = scalar_select %p301, %s20, 0
      %p303 = scmp.lt.s32.totalorder %s298, 1
      %s304 = scalar_select %p303, %s298, 1
      %s305 = smul.addr %s302, 2
      %s306 = sadd.s32 %s304, %s305
      %s307 = smul.addr %s300, 2
      %s308 = sadd.s32 %s306, %s307
      %s309 = smul.addr %s308, 8
      %s310 = scalar_lea.vmem %s3, %s309
      %s311 = smul.u32 2, %s22
      %p312 = scmp.eq.s32.totalorder %s23, 0
      // Predicated region
      $region33: #{sparse_conv2d.1} parent=31 // pred_check
        %p313 = pneg %p312
      $region34: #{sparse_conv2d.1} parent=31 // pred_check_branch
        %315 = sbr.rel (%p313) target = $region36
      $region35: #{sparse_conv2d.1} parent=31 // pred_region
        %316 = vst [vmem:[#allocation2] sm:$0xff] 0.0
        %317 = vst [vmem:[#allocation2 + $0x8] sm:$0xff] 0.0
      $region36: #{sparse_conv2d.1} parent=31 // pred_fallthru
        _
      %v318 = vld [vmem:[#allocation2] sm:$0xff]
      %v319 = vld [vmem:[#allocation2 + $0x8] sm:$0xff]
      %v320 = vld [vmem:[%s293] sm:$0xff]
      %v321 = vld [vmem:[%s284] sm:$0xff]
      %v322 = vld [vmem:[%s284 + $0x8] sm:$0xff]
      %v323 = vld [vmem:[%s284 + $0x10] sm:$0xff]
      %v324 = vld [vmem:[%s284 + $0x18] sm:$0xff]
      %v325 = vld [vmem:[%s284 + $0x20] sm:$0xff]
      %v326 = vld [vmem:[%s284 + $0x28] sm:$0xff]
      %v327 = vld [vmem:[%s284 + $0x30] sm:$0xff]
      %v328 = vld [vmem:[%s284 + $0x38] sm:$0xff]
      %v329 = vld [vmem:[%s284 + $0x40] sm:$0xff]
      %v330 = vld [vmem:[%s284 + $0x48] sm:$0xff]
      %vm331 = vcmask 326656
      %v333 = vsel %vm331, %v320, 0
      %335 = vmatprep.subr.mxu0 %v322
      %336 = vmatpush1.msra.mxu0 %v321
      %337 = vmatprep.subr.mxu0 %v324
      %338 = vmatpush1.msra.mxu0 %v323
      %339 = vmatprep.subr.mxu0 %v326
      %340 = vmatpush1.msra.mxu0 %v325
      %341 = vmatprep.subr.mxu0 %v328
      %342 = vmatpush1.msra.mxu0 %v327
      %343 = vmatprep.subr.mxu0 %v330
      %344 = vmatpush1.msra.mxu0 %v329
      %345 = vmatprep.subr.mxu0 0.0
      %346 = vmatpush1.msra.mxu0 0.0
      %347 = vmatprep.subr.mxu0 0.0
      %348 = vmatpush1.msra.mxu0 0.0
      %349 = vmatprep.subr.mxu0 0.0
      %350 = vmatpush1.msra.mxu0 0.0
      %351 = vmatprep.subr.mxu0 0.0
      %352 = vmatpush1.msra.mxu0 0.0
      %353 = vmatprep.subr.mxu0 0.0
      %354 = vmatpush1.msra.mxu0 0.0
      %355 = vmatprep.subr.mxu0 0.0
      %356 = vmatpush1.msra.mxu0 0.0
      %357 = vmatprep.subr.mxu0 0.0
      %358 = vmatpush1.msra.mxu0 0.0
      %359 = vmatprep.subr.mxu0 0.0
      %360 = vmatpush1.msra.mxu0 0.0
      %361 = vmatprep.subr.mxu0 0.0
      %362 = vmatpush1.msra.mxu0 0.0
      %363 = vmatprep.subr.mxu0 0.0
      %364 = vmatpush1.msra.mxu0 0.0
      %365 = vmatprep.subr.mxu0 0.0
      %366 = vmatpush1.msra.mxu0 0.0
      %367 = vmatprep.subr.mxu0 0.0
      %368 = vmatpush1.msra.mxu0 0.0
      %369 = vmatprep.subr.mxu0 0.0
      %370 = vmatpush1.msra.mxu0 0.0
      %371 = vmatprep.subr.mxu0 0.0
      %372 = vmatpush1.msra.mxu0 0.0
      %373 = vmatprep.subr.mxu0 0.0
      %374 = vmatpush1.msra.mxu0 0.0
      %375 = vmatprep.subr.mxu0 0.0
      %376 = vmatpush1.msra.mxu0 0.0
      %377 = vmatprep.subr.mxu0 0.0
      %378 = vmatpush1.msra.mxu0 0.0
      %379 = vmatprep.subr.mxu0 0.0
      %380 = vmatpush1.msra.mxu0 0.0
      %381 = vmatprep.subr.mxu0 0.0
      %382 = vmatpush1.msra.mxu0 0.0
      %383 = vmatprep.subr.mxu0 0.0
      %384 = vmatpush1.msra.mxu0 0.0
      %385 = vmatprep.subr.mxu0 0.0
      %386 = vmatpush1.msra.mxu0 0.0
      %387 = vmatprep.subr.mxu0 0.0
      %388 = vmatpush1.msra.mxu0 0.0
      %389 = vmatprep.subr.mxu0 0.0
      %390 = vmatpush1.msra.mxu0 0.0
      %391 = vmatprep.subr.mxu0 0.0
      %392 = vmatpush1.msra.mxu0 0.0
      %393 = vmatprep.subr.mxu0 0.0
      %394 = vmatpush1.msra.mxu0 0.0
      %395 = vmatprep.subr.mxu0 0.0
      %396 = vmatpush1.msra.mxu0 0.0
      %397 = vmatprep.subr.mxu0 0.0
      %398 = vmatpush1.msra.mxu0 0.0
      %399 = vmatprep.mubr.f32.mxu0 0.0
      %400 = vmatmul.mubr.f32.gmra.mrb[0].mxu0 %v333
      %v401 = vpop.f32.mrb[0].mxu0
      %v402 = vadd.f32 0.0, %v401
      %v403 = vpop.f32.mrb[0].mxu0
      %v404 = vadd.f32 0.0, %v403
      %405 = vdwg.mxu0
      %v406 = vadd.f32 %v318, %v402
      %v407 = vadd.f32 %v319, %v404
      %408 = vst [vmem:[#allocation2] sm:$0xff] %v406
      %409 = vst [vmem:[#allocation2 + $0x8] sm:$0xff] %v407
      // Predicated region
      $region37: #{sparse_conv2d.1} parent=31 // pred_check
        %p410 = pneg %p312
      $region38: #{sparse_conv2d.1} parent=31 // pred_check_branch
        %412 = sbr.rel (%p410) target = $region40
      $region39: #{sparse_conv2d.1} parent=31 // pred_region
        %v413 = vld [vmem:[#allocation2] sm:$0xff]
        %v414 = vld [vmem:[#allocation2 + $0x8] sm:$0xff]
        %v415 = vld [vmem:[%s297] sm:$0xff]
        %417 = vset.pattern.permute.xlu0 0
        %418 = vperm.xlu0 %417, %v415
        %v419 = vpop.permute.xlu0 %418
        %v421 = vadd.f32 %v413, %v419
        %v422 = vadd.f32 %v414, %v419
        %423 = vst [vmem:[%s310] sm:$0xff] %v421
        %424 = vst [vmem:[%s310 + $0x8] sm:$0xff] %v422
      $region40: #{sparse_conv2d.1} parent=31 // pred_fallthru
        _
      %s425 = smul.u32 2, %s22
      %p426 = scmp.lt.s32.totalorder %s21, 1
      %s427 = scalar_select %p426, %s21, 1
      %p428 = scmp.lt.s32.totalorder %s20, 0
      %s429 = scalar_select %p428, %s20, 0
      %p430 = scmp.lt.s32.totalorder %s425, 1
      %s431 = scalar_select %p430, %s425, 1
      %s432 = smul.addr %s429, 2
      %s433 = sadd.s32 %s431, %s432
      %s434 = smul.addr %s427, 2
      %s435 = sadd.s32 %s433, %s434
      %s436 = smul.addr %s435, 8
      %s437 = scalar_lea.vmem %s3, %s436
      // Predicated region
      $region41: #{sparse_conv2d.1} parent=31 // pred_check
        %p438 = pneg %p148
      $region42: #{sparse_conv2d.1} parent=31 // pred_check_branch
        %440 = sbr.rel (%p438) target = $region44
      $region43: #{sparse_conv2d.1} parent=31 // pred_region
        %s441 = smul.u32 2, %s22
      $region44: #{sparse_conv2d.1} parent=31 // pred_fallthru
        _
    $region32: #{sparse_conv2d.1} parent=5 // pred_fallthru
      _
    %p442 = scmp.le.s32.totalorder 2, %s9
    // Predicated region
    $region45: #{sparse_conv2d.1} parent=5 // pred_check
      %p443 = pneg %p442
    $region46: #{sparse_conv2d.1} parent=5 // pred_check_branch
      %445 = sbr.rel (%p443) target = $region48
    $region47: #{sparse_conv2d.1} parent=5 // pred_region
      %s446 = ssub.s32 %s9, 2
      // Predicated region
      $region49: #{sparse_conv2d.1} parent=47 // pred_check
        %p447 = pneg %p154
      $region50: #{sparse_conv2d.1} parent=47 // pred_check_branch
        %449 = sbr.rel (%p447) target = $region52
      $region51: #{sparse_conv2d.1} parent=47 // pred_region
        %s450 = smul.u32 2, %s26
        %p451 = scmp.lt.s32.totalorder %s25, 1
        %s452 = scalar_select %p451, %s25, 1
        %p453 = scmp.lt.s32.totalorder %s24, 0
        %s454 = scalar_select %p453, %s24, 0
        %p455 = scmp.lt.s32.totalorder %s450, 1
        %s456 = scalar_select %p455, %s450, 1
        %s457 = smul.addr %s454, 2
        %s458 = sadd.s32 %s456, %s457
        %s459 = smul.addr %s452, 2
        %s460 = sadd.s32 %s458, %s459
        %s461 = smul.addr %s460, 8
        %s462 = scalar_lea.vmem %s3, %s461
      $region52: #{sparse_conv2d.1} parent=47 // pred_fallthru
        _
    $region48: #{sparse_conv2d.1} parent=5 // pred_fallthru
      _
  $region6: #{sparse_conv2d.1} parent=0 // loop_footer
    %s13 = sadd.s32 1, %s9
  $region7: #{sparse_conv2d.1} parent=0 // loop_footer_branch
    %8 = sbr.rel target = $region3
  $region8: #{sparse_conv2d.1} parent=0 // loop_exit
    _

</llo_original>
